<compile_context>
chip_gen: v7x
topology: tpu7x:2x2x1
jax: 0.10.0
libtpu: 0.0.40
codegen_flags: <defaults>
</compile_context>

<pallas_src>
import functools

import jax
import jax.numpy as jnp
from jax.experimental import pallas as pl
from jax.experimental.pallas import tpu as pltpu


def _series_decomp_kernel(x_ref, res_ref, mean_ref, pad_ref, *,
                          kernel_size: int, seq_len: int):
    """One (1, L, Wb) block: moving average over axis 1 (time), per lane.

    x_ref    : (1, L, Wb)        input block (the only HBM read)
    res_ref  : (1, L, Wb)        x - moving_mean
    mean_ref : (1, L, Wb)        moving_mean
    pad_ref  : (L + k - 1, Wb)   f32 VMEM scratch holding the replicate-padded
                                 series (built on-chip; never touches HBM)
    """
    k = kernel_size
    L = seq_len
    p = (k - 1) // 2
    W = x_ref.shape[-1]

    x = x_ref[0].astype(jnp.float32)                      # (L, W)

    # Replicate-pad along the time axis entirely on-chip.
    pad_ref[p:p + L, :] = x
    if p > 0:
        pad_ref[0:p, :] = jnp.broadcast_to(x[0:1, :], (p, W))
        pad_ref[p + L:p + L + p, :] = jnp.broadcast_to(x[L - 1:L, :], (p, W))
    xpad = pad_ref[...]                                   # (L + 2p, W)

    # Sliding-window sum of width k via binary doubling: ~2*log2(k) adds
    # instead of k-1 shifted adds (pure VPU/XLU work; deliberately no MXU).
    acc = None        # running sum over the first `cov` window offsets
    cov = 0
    w = 1             # window width currently represented by `cur`
    cur = xpad        # cur[t] = sum_{j=0}^{w-1} xpad[t + j]
    rem = k
    while rem:
        if rem & 1:
            piece = cur[cov:cov + L, :]
            acc = piece if acc is None else acc + piece
            cov += w
        rem >>= 1
        if rem:
            n = cur.shape[0]
            cur = cur[0:n - w, :] + cur[w:n, :]
            w *= 2

    mean = acc * (1.0 / k)
    mean_ref[0] = mean.astype(mean_ref.dtype)
    res_ref[0] = (x - mean).astype(res_ref.dtype)


def _decomp_work(work: jax.Array, kernel_size: int):
    """Runs the kernel on `work` of shape (G, L, W); returns (res, mean)."""
    G, L, W = work.shape
    p = (kernel_size - 1) // 2

    # Lane chunking: whole width if small, else 512-lane tiles (multiple of
    # 128, so the BlockSpec constraint holds even when 512 doesn't divide W;
    # the padded boundary block is safe because the op is lane-elementwise).
    Wb = W if W <= 512 else 512
    grid = (G, pl.cdiv(W, Wb))

    kernel = functools.partial(_series_decomp_kernel,
                               kernel_size=kernel_size, seq_len=L)

    return pl.pallas_call(
        kernel,
        out_shape=(jax.ShapeDtypeStruct((G, L, W), work.dtype),
                   jax.ShapeDtypeStruct((G, L, W), work.dtype)),
        grid=grid,
        in_specs=[pl.BlockSpec((1, L, Wb), lambda g, c: (g, 0, c))],
        out_specs=(pl.BlockSpec((1, L, Wb), lambda g, c: (g, 0, c)),
                   pl.BlockSpec((1, L, Wb), lambda g, c: (g, 0, c))),
        scratch_shapes=[pltpu.VMEM((L + 2 * p, Wb), jnp.float32)],
        compiler_params=pltpu.CompilerParams(
            dimension_semantics=("parallel", "parallel"),
            vmem_limit_bytes=32 * 1024 * 1024),
    )(work)


def series_decomp(x: jax.Array, kernel_size: int):
    """Returns (res, moving_mean), both shaped like x = (B, L, C)."""
    assert kernel_size % 2 == 1, "kernel_size must be odd (as in the PyTorch module)"
    B, L, C = x.shape

    # Lane-density fold: for small channel counts, fold batch into the lane
    # axis so vector stores are not mostly masked; skip when C is already
    # lane-dense to avoid unnecessary transpose passes through HBM.
    fold = C < 128
    if fold:
        work = jnp.transpose(x, (1, 0, 2)).reshape(1, L, B * C)
    else:
        work = x

    res_w, mean_w = _decomp_work(work, kernel_size)

    if fold:
        res = jnp.transpose(res_w.reshape(L, B, C), (1, 0, 2))
        mean = jnp.transpose(mean_w.reshape(L, B, C), (1, 0, 2))
        return res, mean
    return res_w, mean_w


def _reference(x, kernel_size):
    """Pure-JAX reference matching the PyTorch semantics."""
    pad = (kernel_size - 1) // 2
    front = jnp.repeat(x[:, 0:1, :], pad, axis=1)
    end = jnp.repeat(x[:, -1:, :], pad, axis=1)
    xpad = jnp.concatenate([front, x, end], axis=1)
    L = x.shape[1]
    windows = jnp.stack([xpad[:, j:j + L, :] for j in range(kernel_size)], axis=0)
    mean = jnp.mean(windows, axis=0)
    return x - mean, mean


if __name__ == "__main__":
    B, L, C = 2, 16, 8
    kernel_size = 5

    key = jax.random.PRNGKey(0)
    x = jax.random.normal(key, (B, L, C), dtype=jnp.float32)

    res, mean = series_decomp(x, kernel_size)
    jax.block_until_ready((res, mean))

    res_ref, mean_ref = _reference(x, kernel_size)
    assert jnp.allclose(res, res_ref, atol=1e-5, rtol=1e-5)
    assert jnp.allclose(mean, mean_ref, atol=1e-5, rtol=1e-5)

    print("KERNEL_OK")
</pallas_src>

<mosaic_0001>
module attributes {stable_mosaic.version = 11 : i64} {
  func.func @_series_decomp_kernel(%arg0: i32, %arg1: i32, %arg2: memref<1x16x16xf32, #tpu.memory_space<vmem>>, %arg3: memref<1x16x16xf32, #tpu.memory_space<vmem>>, %arg4: memref<1x16x16xf32, #tpu.memory_space<vmem>>, %arg5: memref<20x16xf32, #tpu.memory_space<vmem>>) attributes {dimension_semantics = [#tpu.dimension_semantics<parallel>, #tpu.dimension_semantics<parallel>], iteration_bounds = array<i64: 1, 1>, scalar_prefetch = 0 : i64, scratch_operands = 1 : i64, tpu.core_type = #tpu.core_type<tc>, window_params = [{transform_indices = @transform_0, window_bounds = array<i64: 1, 16, 16>}, {transform_indices = @transform_1, window_bounds = array<i64: 1, 16, 16>}, {transform_indices = @transform_2, window_bounds = array<i64: 1, 16, 16>}]} {
    %c0 = arith.constant 0 : index
    %c0_0 = arith.constant 0 : index
    %c0_1 = arith.constant 0 : index
    %0 = vector.load %arg2[%c0, %c0_0, %c0_1] : memref<1x16x16xf32, #tpu.memory_space<vmem>>, vector<1x16x16xf32>
    %1 = vector.shape_cast %0 : vector<1x16x16xf32> to vector<16x16xf32>
    %c2 = arith.constant 2 : index
    %c0_2 = arith.constant 0 : index
    %2 = vector.load %arg5[%c2, %c0_2] : memref<20x16xf32, #tpu.memory_space<vmem>>, vector<16x16xf32>
    tpu.vector_store %arg5[%c2, %c0_2], %1 {strides = array<i32>} : memref<20x16xf32, #tpu.memory_space<vmem>>, vector<16x16xf32>,
    %3 = vector.extract_strided_slice %1 {offsets = [0, 0], sizes = [1, 16], strides = [1, 1]} : vector<16x16xf32> to vector<1x16xf32>
    %4 = vector.shape_cast %3 : vector<1x16xf32> to vector<1x16xf32>
    %5 = vector.broadcast %4 : vector<1x16xf32> to vector<2x16xf32>
    %c0_3 = arith.constant 0 : index
    %c0_4 = arith.constant 0 : index
    %6 = vector.load %arg5[%c0_3, %c0_4] : memref<20x16xf32, #tpu.memory_space<vmem>>, vector<2x16xf32>
    tpu.vector_store %arg5[%c0_3, %c0_4], %5 {strides = array<i32>} : memref<20x16xf32, #tpu.memory_space<vmem>>, vector<2x16xf32>,
    %7 = vector.extract_strided_slice %1 {offsets = [15, 0], sizes = [1, 16], strides = [1, 1]} : vector<16x16xf32> to vector<1x16xf32>
    %8 = vector.shape_cast %7 : vector<1x16xf32> to vector<1x16xf32>
    %9 = vector.broadcast %8 : vector<1x16xf32> to vector<2x16xf32>
    %c18 = arith.constant 18 : index
    %c0_5 = arith.constant 0 : index
    %10 = vector.load %arg5[%c18, %c0_5] : memref<20x16xf32, #tpu.memory_space<vmem>>, vector<2x16xf32>
    tpu.vector_store %arg5[%c18, %c0_5], %9 {strides = array<i32>} : memref<20x16xf32, #tpu.memory_space<vmem>>, vector<2x16xf32>,
    %c0_6 = arith.constant 0 : index
    %c0_7 = arith.constant 0 : index
    %11 = vector.load %arg5[%c0_6, %c0_7] : memref<20x16xf32, #tpu.memory_space<vmem>>, vector<20x16xf32>
    %12 = vector.extract_strided_slice %11 {offsets = [0, 0], sizes = [16, 16], strides = [1, 1]} : vector<20x16xf32> to vector<16x16xf32>
    %13 = vector.extract_strided_slice %11 {offsets = [0, 0], sizes = [19, 16], strides = [1, 1]} : vector<20x16xf32> to vector<19x16xf32>
    %14 = vector.extract_strided_slice %11 {offsets = [1, 0], sizes = [19, 16], strides = [1, 1]} : vector<20x16xf32> to vector<19x16xf32>
    %15 = arith.addf %13, %14 : vector<19x16xf32>
    %16 = vector.extract_strided_slice %15 {offsets = [0, 0], sizes = [17, 16], strides = [1, 1]} : vector<19x16xf32> to vector<17x16xf32>
    %17 = vector.extract_strided_slice %15 {offsets = [2, 0], sizes = [17, 16], strides = [1, 1]} : vector<19x16xf32> to vector<17x16xf32>
    %18 = arith.addf %16, %17 : vector<17x16xf32>
    %19 = vector.extract_strided_slice %18 {offsets = [1, 0], sizes = [16, 16], strides = [1, 1]} : vector<17x16xf32> to vector<16x16xf32>
    %20 = arith.addf %12, %19 : vector<16x16xf32>
    %cst = arith.constant 2.000000e-01 : f32
    %21 = vector.broadcast %cst : f32 to vector<16x16xf32>
    %22 = arith.mulf %20, %21 : vector<16x16xf32>
    %c0_8 = arith.constant 0 : index
    %c0_9 = arith.constant 0 : index
    %c0_10 = arith.constant 0 : index
    %23 = vector.load %arg4[%c0_8, %c0_9, %c0_10] : memref<1x16x16xf32, #tpu.memory_space<vmem>>, vector<1x16x16xf32>
    %24 = vector.shape_cast %23 : vector<1x16x16xf32> to vector<16x16xf32>
    %25 = vector.shape_cast %22 : vector<16x16xf32> to vector<1x16x16xf32>
    tpu.vector_store %arg4[%c0_8, %c0_9, %c0_10], %25 {strides = array<i32>} : memref<1x16x16xf32, #tpu.memory_space<vmem>>, vector<1x16x16xf32>,
    %26 = arith.subf %1, %22 : vector<16x16xf32>
    %c0_11 = arith.constant 0 : index
    %c0_12 = arith.constant 0 : index
    %c0_13 = arith.constant 0 : index
    %27 = vector.load %arg3[%c0_11, %c0_12, %c0_13] : memref<1x16x16xf32, #tpu.memory_space<vmem>>, vector<1x16x16xf32>
    %28 = vector.shape_cast %27 : vector<1x16x16xf32> to vector<16x16xf32>
    %29 = vector.shape_cast %26 : vector<16x16xf32> to vector<1x16x16xf32>
    tpu.vector_store %arg3[%c0_11, %c0_12, %c0_13], %29 {strides = array<i32>} : memref<1x16x16xf32, #tpu.memory_space<vmem>>, vector<1x16x16xf32>,
    return
  }
  func.func @transform_0(%arg0: i32, %arg1: i32) -> (i32, i32, i32) {
    %c0_i32 = arith.constant 0 : i32
    %c0_i32_0 = arith.constant 0 : i32
    return %arg0, %c0_i32, %arg1 : i32, i32, i32
  }
  func.func @transform_1(%arg0: i32, %arg1: i32) -> (i32, i32, i32) {
    %c0_i32 = arith.constant 0 : i32
    %c0_i32_0 = arith.constant 0 : i32
    return %arg0, %c0_i32, %arg1 : i32, i32, i32
  }
  func.func @transform_2(%arg0: i32, %arg1: i32) -> (i32, i32, i32) {
    %c0_i32 = arith.constant 0 : i32
    %c0_i32_0 = arith.constant 0 : i32
    return %arg0, %c0_i32, %arg1 : i32, i32, i32
  }
}

</mosaic_0001>

<llo_original>
// kernel: tpu_custom_call.1
$region0: #{tpu_custom_call.1}
  #allocation0 [shape = 'u32[]', space=smem, size = 0x4, offset = 0x4, fixed_abs, tag = 'smem constant byte address 0x4 - core index']
  #allocation1 [shape = 'u32[144,128]{1,0:T(1,128)}', space=vmem, size = 0x12000, scoped, tag = 'internal scratch']
  #allocation2 [shape = 'f32[20,16]{1,0:T(8,128)}', space=vmem, size = 0x3000, scoped, tag = 'scratch operand']
  %s0 = inlined_call_operand.hbm [shape: f32[1,16,16], index: 0, kind: input, shape index: {}]
  %s1 = inlined_call_operand.hbm [shape: f32[1,16,16], index: 1, kind: output, shape index: {0}]
  %s2 = inlined_call_operand.hbm [shape: f32[1,16,16], index: 2, kind: output, shape index: {1}]
  %3 = xla_tuple %s1, %s2
  %s4 = sld [smem:[#allocation0]]
  $region26: #{tpu_custom_call.1} parent=0
    _
  %s6 = ssub.s32 1, %s4
  %s7 = scalar_select 0, %s6, %s4
  $region1: #{tpu_custom_call.1} parent=0
    #allocation3 [shape = 'u8[8192]{0}', space=vmem, size = 0x2000, scoped, tag = 'input window, operand 0, single buffered']
    #allocation4 [shape = 's32[1]{0}', space=sflag, size = 0x4, scoped, tag = 'scoped memory for tpu_custom_call.1']
    #allocation5 [shape = 's32[1]{0}', space=sflag, size = 0x4, scoped, tag = 'scoped memory for tpu_custom_call.1']
    #allocation6 [shape = 'u8[8192]{0}', space=vmem, size = 0x2000, scoped, tag = 'output window, operand 0, single buffered']
    #allocation7 [shape = 'u8[8192]{0}', space=vmem, size = 0x2000, scoped, tag = 'output window, operand 1, single buffered']
    #allocation8 [shape = 's32[1]{0}', space=sflag, size = 0x4, scoped, tag = 'scoped memory for tpu_custom_call.1']
    %8 = vsyncpa [#allocation4], 0
    %9 = vsyncpa [#allocation5], 0
    %10 = vsyncpa [#allocation8], 0
    // Predicated region
    $region2: #{tpu_custom_call.1} parent=1 // pred_check
      _
    $region3: #{tpu_custom_call.1} parent=1 // pred_check_branch
      %12 = sbr.rel (0) target = $region5
    $region4: #{tpu_custom_call.1} parent=1 // pred_region
      %s14 = ssub.s32 256, 256
      %15 = vsyncadd [#allocation4], %s14
      %s16 = sshll.u32 [#allocation3], 4
      %s17 = int_to_ptr.vmem [resolvable:$true] %s16
      %22 = dma.hbm_to_vmem [thread:$0]  %s0, 256, %s17, [#allocation4], 128, 128, 8
    $region5: #{tpu_custom_call.1} parent=1 // pred_fallthru
      _
    // Predicated region
    $region6: #{tpu_custom_call.1} parent=1 // pred_check
      _
    $region7: #{tpu_custom_call.1} parent=1 // pred_check_branch
      %24 = sbr.rel (0) target = $region9
    $region8: #{tpu_custom_call.1} parent=1 // pred_region
      %25 = dma.done [#allocation4], 256
    $region9: #{tpu_custom_call.1} parent=1 // pred_fallthru
      _
    %v26 = vld [vmem:[#allocation3] sm:$0xff]
    %v27 = vld [vmem:[#allocation3 + $0x8] sm:$0xff]
    %vm28 = vcmask 130048
    %29 = vst.msk [vmem:[#allocation2 + $0x2] sm:$0xff] %vm28, %v26
    %30 = vst.msk [vmem:[#allocation2 + $0xa] sm:$0xff] %vm28, %v27
    %v31 = vlaneseq
    %v32 = vshrl.u32 %v31, 7
    %v33 = vsub.s32 0, %v32
    %v34 = vrot.slane %v26, %v33
    %vm35 = vcmask 123904
    %36 = vst.msk [vmem:[#allocation2] sm:$0x3] %vm35, %v34
    %v37 = vlaneseq
    %v38 = vshrl.u32 %v37, 7
    %v39 = vsub.s32 7, %v38
    %v40 = vrot.slane %v27, %v39
    %41 = vst.msk [vmem:[#allocation2 + $0x12] sm:$0x3] %vm35, %v40
    %v42 = vld [vmem:[#allocation2] sm:$0xff]
    %v43 = vld [vmem:[#allocation2 + $0x8] sm:$0xff]
    %v44 = vld [vmem:[#allocation2 + $0x10] sm:$0xf]
    %vm48 = vcmask 1046528
    %v49 = vrot.slane %v42, 1
    %v50 = vrot.slane %v43, 1
    %v51 = vsel %vm48, %v49, %v50
    %v52 = vrot.slane %v44, 1
    %v53 = vsel %vm48, %v50, %v52
    %v57 = vadd.f32 %v42, %v51
    %v58 = vadd.f32 %v43, %v53
    %v59 = vadd.f32 %v44, %v52
    %vm63 = vcmask 1045504
    %v64 = vrot.slane %v57, 2
    %v65 = vrot.slane %v58, 2
    %v66 = vsel %vm63, %v64, %v65
    %v67 = vrot.slane %v59, 2
    %v68 = vsel %vm63, %v65, %v67
    %v72 = vadd.f32 %v57, %v66
    %v73 = vadd.f32 %v58, %v68
    %v74 = vadd.f32 %v59, %v67
    %v78 = vrot.slane %v72, 1
    %v79 = vrot.slane %v73, 1
    %v80 = vsel %vm48, %v78, %v79
    %v81 = vrot.slane %v74, 1
    %v82 = vsel %vm48, %v79, %v81
    %v85 = vadd.f32 %v42, %v80
    %v86 = vadd.f32 %v43, %v82
    %v87 = vmul.f32 %v85, 0.2
    %v88 = vmul.f32 %v86, 0.2
    %89 = vst.msk [vmem:[#allocation7] sm:$0xff] %vm28, %v87
    %90 = vst.msk [vmem:[#allocation7 + $0x8] sm:$0xff] %vm28, %v88
    %v91 = vsub.f32 %v26, %v87
    %v92 = vsub.f32 %v27, %v88
    %93 = vst.msk [vmem:[#allocation6] sm:$0xff] %vm28, %v91
    %94 = vst.msk [vmem:[#allocation6 + $0x8] sm:$0xff] %vm28, %v92
    // Predicated region
    $region10: #{tpu_custom_call.1} parent=1 // pred_check
      _
    $region11: #{tpu_custom_call.1} parent=1 // pred_check_branch
      %96 = sbr.rel (0) target = $region13
    $region12: #{tpu_custom_call.1} parent=1 // pred_region
      %s98 = ssub.s32 256, 256
      %99 = vsyncadd [#allocation5], %s98
      %s100 = sshll.u32 [#allocation6], 4
      %s101 = int_to_ptr.vmem [resolvable:$true] %s100
      %106 = dma.vmem_to_hbm [thread:$0]  %s101, 256, %s1, [#allocation5], 128, 128, 8
    $region13: #{tpu_custom_call.1} parent=1 // pred_fallthru
      _
    // Predicated region
    $region14: #{tpu_custom_call.1} parent=1 // pred_check
      _
    $region15: #{tpu_custom_call.1} parent=1 // pred_check_branch
      %108 = sbr.rel (0) target = $region17
    $region16: #{tpu_custom_call.1} parent=1 // pred_region
      %s110 = ssub.s32 256, 256
      %111 = vsyncadd [#allocation8], %s110
      %s112 = sshll.u32 [#allocation7], 4
      %s113 = int_to_ptr.vmem [resolvable:$true] %s112
      %118 = dma.vmem_to_hbm [thread:$0]  %s113, 256, %s2, [#allocation8], 128, 128, 8
    $region17: #{tpu_custom_call.1} parent=1 // pred_fallthru
      _
    // Predicated region
    $region18: #{tpu_custom_call.1} parent=1 // pred_check
      _
    $region19: #{tpu_custom_call.1} parent=1 // pred_check_branch
      %120 = sbr.rel (0) target = $region21
    $region20: #{tpu_custom_call.1} parent=1 // pred_region
      %121 = dma.done [#allocation5], 256
    $region21: #{tpu_custom_call.1} parent=1 // pred_fallthru
      _
    // Predicated region
    $region22: #{tpu_custom_call.1} parent=1 // pred_check
      _
    $region23: #{tpu_custom_call.1} parent=1 // pred_check_branch
      %123 = sbr.rel (0) target = $region25
    $region24: #{tpu_custom_call.1} parent=1 // pred_region
      %124 = dma.done [#allocation8], 256
    $region25: #{tpu_custom_call.1} parent=1 // pred_fallthru
      _
    %125 = vsyncpa [#allocation4], 1
    %126 = vsyncpa [#allocation5], 1
    %127 = vsyncpa [#allocation8], 1

</llo_original>
